<compile_context>
chip_gen: v7x
topology: tpu7x:2x2x1
jax: 0.10.0
libtpu: 0.0.40
codegen_flags: <defaults>
</compile_context>

<pallas_src>
import jax
import jax.numpy as jnp
from jax.experimental import pallas as pl
from jax.experimental.pallas import tpu as pltpu

INPUT_SIZE = 992
HIDDEN_SIZE = 7
OUTPUT_SIZE = 1
PAD = 128          # lane-padded width for hidden / output
TM_MAX = 512       # batch tile (rows); divisible by 8, ~2 MB X tile in VMEM


def _mlp_kernel(x_ref, w1_ref, b1_ref, w2_ref, b2_ref, o_ref):
    # (TM, 992) @ (992, 128) -> (TM, 128) on the MXU, f32 accumulate.
    h = jnp.dot(x_ref[...], w1_ref[...], preferred_element_type=jnp.float32)
    h = jax.nn.sigmoid(h + b1_ref[...])              # broadcast (1, 128)
    # Linear(7 -> 1): VPU multiply by the lane-padded weight row, then a lane
    # reduction (XLU).  Padding lanes of w2_ref are exactly zero, so the
    # sigmoid(0)=0.5 padding lanes of h contribute nothing.
    o = jnp.sum(h * w2_ref[...], axis=-1, keepdims=True)   # (TM, 1)
    # Lane-dense (unmasked) store: broadcast across 128 lanes; only column 0
    # is consumed by the wrapper.
    o_ref[...] = jnp.broadcast_to(o, o_ref.shape) + b2_ref[...]


def prepare_params(w1, b1, w2, b2):
    """Pad parameters to lane-dense shapes ONCE, outside the forward path.

    w1: (992, 7), b1: (7,), w2: (7, 1), b2: (1,)   (x @ w convention)
    """
    w1_p = jnp.zeros((INPUT_SIZE, PAD), jnp.float32).at[:, :HIDDEN_SIZE].set(w1)
    b1_p = jnp.zeros((1, PAD), jnp.float32).at[0, :HIDDEN_SIZE].set(b1)
    # Second layer collapses to a single 7-vector packed into one 128-lane row
    # (zeros elsewhere) -> second matmul replaced by a VPU/XLU reduction.
    w2_row = jnp.zeros((1, PAD), jnp.float32).at[0, :HIDDEN_SIZE].set(
        jnp.asarray(w2, jnp.float32).reshape(-1))
    b2_p = jnp.broadcast_to(jnp.asarray(b2, jnp.float32).reshape(1, 1), (1, PAD))
    return w1_p, b1_p, w2_row, b2_p


def mlp_forward(x, padded_params):
    """x: (B, 992) f32.  Returns (B,) f32, matching `self.net(X).flatten()`."""
    w1_p, b1_p, w2_row, b2_p = padded_params
    B = x.shape[0]

    # Pad batch up to a multiple of the tile (multiple of 8).  Padding rows
    # are inert; they are sliced away below.
    b8 = ((B + 7) // 8) * 8
    tm = min(TM_MAX, b8)
    b_pad = ((b8 + tm - 1) // tm) * tm
    if b_pad != B:
        x = jnp.pad(x, ((0, b_pad - B), (0, 0)))

    grid = (b_pad // tm,)

    out_padded = pl.pallas_call(
        _mlp_kernel,
        out_shape=jax.ShapeDtypeStruct((b_pad, PAD), jnp.float32),
        grid_spec=pltpu.PrefetchScalarGridSpec(
            num_scalar_prefetch=0,
            grid=grid,
            in_specs=[
                # X: batch-tiled, pipelined across the grid.
                pl.BlockSpec((tm, INPUT_SIZE), lambda i: (i, 0)),
                # Weights / biases: VMEM-resident across all grid steps.
                pl.BlockSpec((INPUT_SIZE, PAD), lambda i: (0, 0)),
                pl.BlockSpec((1, PAD), lambda i: (0, 0)),
                pl.BlockSpec((1, PAD), lambda i: (0, 0)),
                pl.BlockSpec((1, PAD), lambda i: (0, 0)),
            ],
            out_specs=pl.BlockSpec((tm, PAD), lambda i: (i, 0)),
        ),
        compiler_params=pltpu.CompilerParams(
            # Batch tiles are independent -> parallel (v7x megacore sharding;
            # no-op on single-TC v5e/v6e).
            dimension_semantics=("parallel",),
        ),
    )(x, w1_p, b1_p, w2_row, b2_p)

    # nn.Linear output is (B, 1); .flatten() -> (B,)
    return out_padded[:B, 0]


def _xavier_normal(key, fan_in, fan_out):
    # torch.nn.init.xavier_normal_: std = sqrt(2 / (fan_in + fan_out))
    std = jnp.sqrt(2.0 / (fan_in + fan_out))
    return std * jax.random.normal(key, (fan_in, fan_out), dtype=jnp.float32)


def _reference(x, w1, b1, w2, b2):
    return (jax.nn.sigmoid(x @ w1 + b1) @ w2 + b2).reshape(-1)


if __name__ == "__main__":
    key = jax.random.PRNGKey(0)
    k_x1, k_x2, k_w1, k_w2 = jax.random.split(key, 4)

    # Deterministic parameter init (xavier_normal weights, bias = 0.1)
    w1 = _xavier_normal(k_w1, INPUT_SIZE, HIDDEN_SIZE)
    b1 = jnp.full((HIDDEN_SIZE,), 0.1, dtype=jnp.float32)
    w2 = _xavier_normal(k_w2, HIDDEN_SIZE, OUTPUT_SIZE)
    b2 = jnp.full((OUTPUT_SIZE,), 0.1, dtype=jnp.float32)

    params = prepare_params(w1, b1, w2, b2)   # padded once, reused per call
    fwd = jax.jit(mlp_forward)

    # --- small batch (single tile) ---
    B = 8
    x = jax.random.normal(k_x1, (B, INPUT_SIZE), dtype=jnp.float32)
    out = jax.block_until_ready(fwd(x, params))
    ref = _reference(x, w1, b1, w2, b2)
    assert out.shape == (B,), out.shape
    assert jnp.allclose(out, ref, atol=1e-5, rtol=1e-5), (out, ref)

    # --- larger batch: exercises batch tiling + tail padding (B % TM != 0) ---
    B2 = 1000
    x2 = jax.random.normal(k_x2, (B2, INPUT_SIZE), dtype=jnp.float32)
    out2 = jax.block_until_ready(fwd(x2, params))
    ref2 = _reference(x2, w1, b1, w2, b2)
    assert out2.shape == (B2,), out2.shape
    assert jnp.allclose(out2, ref2, atol=1e-5, rtol=1e-5)

    print("KERNEL_OK")
</pallas_src>

<mosaic_0001>
module attributes {stable_mosaic.version = 11 : i64} {
  func.func @_mlp_kernel(%arg0: i32, %arg1: memref<8x992xf32, #tpu.memory_space<vmem>>, %arg2: memref<992x128xf32, #tpu.memory_space<vmem>>, %arg3: memref<1x128xf32, #tpu.memory_space<vmem>>, %arg4: memref<1x128xf32, #tpu.memory_space<vmem>>, %arg5: memref<1x128xf32, #tpu.memory_space<vmem>>, %arg6: memref<8x128xf32, #tpu.memory_space<vmem>>) attributes {dimension_semantics = [#tpu.dimension_semantics<parallel>], iteration_bounds = array<i64: 1>, scalar_prefetch = 0 : i64, scratch_operands = 0 : i64, tpu.core_type = #tpu.core_type<tc>, window_params = [{transform_indices = @transform_0, window_bounds = array<i64: 8, 992>}, {pipeline_mode = #tpu.pipeline_mode<synchronous>, transform_indices = @transform_1, window_bounds = array<i64: 992, 128>}, {pipeline_mode = #tpu.pipeline_mode<synchronous>, transform_indices = @transform_2, window_bounds = array<i64: 1, 128>}, {pipeline_mode = #tpu.pipeline_mode<synchronous>, transform_indices = @transform_3, window_bounds = array<i64: 1, 128>}, {pipeline_mode = #tpu.pipeline_mode<synchronous>, transform_indices = @transform_4, window_bounds = array<i64: 1, 128>}, {transform_indices = @transform_5, window_bounds = array<i64: 8, 128>}]} {
    %c0 = arith.constant 0 : index
    %c0_0 = arith.constant 0 : index
    %0 = vector.load %arg1[%c0, %c0_0] : memref<8x992xf32, #tpu.memory_space<vmem>>, vector<8x992xf32>
    %c0_1 = arith.constant 0 : index
    %c0_2 = arith.constant 0 : index
    %1 = vector.load %arg2[%c0_1, %c0_2] : memref<992x128xf32, #tpu.memory_space<vmem>>, vector<992x128xf32>
    %cst = arith.constant dense<0.000000e+00> : vector<8x128xf32>
    %2 = tpu.matmul %0, %1, %cst {dimension_numbers = #tpu.dot_dimension_numbers<[1], [0], [0], [1], [0, 0, 1, 1], [], []>} : vector<8x992xf32>, vector<992x128xf32>, vector<8x128xf32> -> vector<8x128xf32>
    %c0_3 = arith.constant 0 : index
    %c0_4 = arith.constant 0 : index
    %3 = vector.load %arg3[%c0_3, %c0_4] : memref<1x128xf32, #tpu.memory_space<vmem>>, vector<1x128xf32>
    %4 = vector.broadcast %3 : vector<1x128xf32> to vector<8x128xf32>
    %5 = arith.addf %2, %4 : vector<8x128xf32>
    %6 = arith.negf %5 : vector<8x128xf32>
    %7 = math.exp %6 : vector<8x128xf32>
    %cst_5 = arith.constant 1.000000e+00 : f32
    %8 = vector.broadcast %cst_5 : f32 to vector<8x128xf32>
    %9 = arith.addf %8, %7 : vector<8x128xf32>
    %10 = arith.divf %8, %9 : vector<8x128xf32>
    %c0_6 = arith.constant 0 : index
    %c0_7 = arith.constant 0 : index
    %11 = vector.load %arg4[%c0_6, %c0_7] : memref<1x128xf32, #tpu.memory_space<vmem>>, vector<1x128xf32>
    %12 = vector.broadcast %11 : vector<1x128xf32> to vector<8x128xf32>
    %13 = arith.mulf %10, %12 : vector<8x128xf32>
    %cst_8 = arith.constant dense<0.000000e+00> : vector<8xf32>
    %14 = vector.multi_reduction <add>, %13, %cst_8 [1] : vector<8x128xf32> to vector<8xf32>
    %15 = vector.shape_cast %14 : vector<8xf32> to vector<8x1xf32>
    %16 = vector.shape_cast %15 : vector<8x1xf32> to vector<8x1xf32>
    %17 = vector.broadcast %16 : vector<8x1xf32> to vector<8x128xf32>
    %c0_9 = arith.constant 0 : index
    %c0_10 = arith.constant 0 : index
    %18 = vector.load %arg5[%c0_9, %c0_10] : memref<1x128xf32, #tpu.memory_space<vmem>>, vector<1x128xf32>
    %19 = vector.broadcast %18 : vector<1x128xf32> to vector<8x128xf32>
    %20 = arith.addf %17, %19 : vector<8x128xf32>
    %c0_11 = arith.constant 0 : index
    %c0_12 = arith.constant 0 : index
    %21 = vector.load %arg6[%c0_11, %c0_12] : memref<8x128xf32, #tpu.memory_space<vmem>>, vector<8x128xf32>
    tpu.vector_store %arg6[%c0_11, %c0_12], %20 {strides = array<i32>} : memref<8x128xf32, #tpu.memory_space<vmem>>, vector<8x128xf32>,
    return
  }
  func.func @transform_0(%arg0: i32) -> (i32, i32) {
    %c0_i32 = arith.constant 0 : i32
    %c0_i32_0 = arith.constant 0 : i32
    return %arg0, %c0_i32 : i32, i32
  }
  func.func @transform_1(%arg0: i32) -> (i32, i32) {
    %c0_i32 = arith.constant 0 : i32
    %c0_i32_0 = arith.constant 0 : i32
    %c0_i32_1 = arith.constant 0 : i32
    return %c0_i32, %c0_i32_0 : i32, i32
  }
  func.func @transform_2(%arg0: i32) -> (i32, i32) {
    %c0_i32 = arith.constant 0 : i32
    %c0_i32_0 = arith.constant 0 : i32
    %c0_i32_1 = arith.constant 0 : i32
    return %c0_i32, %c0_i32_0 : i32, i32
  }
  func.func @transform_3(%arg0: i32) -> (i32, i32) {
    %c0_i32 = arith.constant 0 : i32
    %c0_i32_0 = arith.constant 0 : i32
    %c0_i32_1 = arith.constant 0 : i32
    return %c0_i32, %c0_i32_0 : i32, i32
  }
  func.func @transform_4(%arg0: i32) -> (i32, i32) {
    %c0_i32 = arith.constant 0 : i32
    %c0_i32_0 = arith.constant 0 : i32
    %c0_i32_1 = arith.constant 0 : i32
    return %c0_i32, %c0_i32_0 : i32, i32
  }
  func.func @transform_5(%arg0: i32) -> (i32, i32) {
    %c0_i32 = arith.constant 0 : i32
    %c0_i32_0 = arith.constant 0 : i32
    return %arg0, %c0_i32 : i32, i32
  }
}

</mosaic_0001>

<llo_original>
// kernel: mlp_forward.1
$region0: #{mlp_forward.1}
  #allocation0 [shape = 'u32[]', space=smem, size = 0x4, offset = 0x4, fixed_abs, tag = 'smem constant byte address 0x4 - core index']
  #allocation1 [shape = 'u32[144,128]{1,0:T(1,128)}', space=vmem, size = 0x12000, scoped, tag = 'internal scratch']
  %s0 = inlined_call_operand.hbm [shape: f32[8,992], index: 0, kind: input, shape index: {}]
  %s1 = inlined_call_operand.hbm [shape: f32[992,128], index: 1, kind: input, shape index: {}]
  %s2 = inlined_call_operand.vmem [shape: f32[1,128], index: 2, kind: input, shape index: {}]
  %s3 = inlined_call_operand.vmem [shape: f32[1,128], index: 3, kind: input, shape index: {}]
  %s4 = inlined_call_operand.vmem [shape: f32[1,128], index: 4, kind: input, shape index: {}]
  %s5 = inlined_call_operand.vmem [shape: f32[8,128], index: 5, kind: output, shape index: {}]
  %s6 = sld [smem:[#allocation0]]
  $region38: #{mlp_forward.1} parent=0
    _
  %s8 = ssub.s32 1, %s6
  %s9 = scalar_select 0, %s8, %s6
  $region1: #{mlp_forward.1} parent=0
    #allocation2 [shape = 'u8[32768]{0}', space=vmem, size = 0x8000, scoped, tag = 'input window, operand 0, single buffered']
    #allocation3 [shape = 's32[1]{0}', space=sflag, size = 0x4, scoped, tag = 'scoped memory for mlp_forward.1']
    #allocation4 [shape = 'u8[507904]{0}', space=vmem, size = 0x7c000, scoped, tag = 'input window, operand 1, single buffered']
    #allocation5 [shape = 's32[1]{0}', space=sflag, size = 0x4, scoped, tag = 'scoped memory for mlp_forward.1']
    %10 = vsyncpa [#allocation3], 0
    %11 = vsyncpa [#allocation5], 0
    // Predicated region
    $region2: #{mlp_forward.1} parent=1 // pred_check
      _
    $region3: #{mlp_forward.1} parent=1 // pred_check_branch
      %13 = sbr.rel (0) target = $region5
    $region4: #{mlp_forward.1} parent=1 // pred_region
      %s15 = ssub.s32 1024, 1024
      %16 = vsyncadd [#allocation3], %s15
      %s18 = sshll.u32 [#allocation2], 4
      %s19 = int_to_ptr.vmem [resolvable:$true] %s18
      %21 = dma.hbm_to_vmem [thread:$0]  %s0, 1024, %s19, [#allocation3]
    $region5: #{mlp_forward.1} parent=1 // pred_fallthru
      _
    // Predicated region
    $region6: #{mlp_forward.1} parent=1 // pred_check
      _
    $region7: #{mlp_forward.1} parent=1 // pred_check_branch
      %23 = sbr.rel (0) target = $region9
    $region8: #{mlp_forward.1} parent=1 // pred_region
      %s25 = ssub.s32 15872, 15872
      %26 = vsyncadd [#allocation5], %s25
      %s27 = sshll.u32 [#allocation4], 4
      %s28 = int_to_ptr.vmem [resolvable:$true] %s27
      %33 = dma.hbm_to_vmem [thread:$0]  %s1, 15872, %s28, [#allocation5], 128, 128, 8
    $region9: #{mlp_forward.1} parent=1 // pred_fallthru
      _
    // Predicated region
    $region10: #{mlp_forward.1} parent=1 // pred_check
      _
    $region11: #{mlp_forward.1} parent=1 // pred_check_branch
      %35 = sbr.rel (0) target = $region13
    $region12: #{mlp_forward.1} parent=1 // pred_region
      _
    $region13: #{mlp_forward.1} parent=1 // pred_fallthru
      _
    // Predicated region
    $region14: #{mlp_forward.1} parent=1 // pred_check
      _
    $region15: #{mlp_forward.1} parent=1 // pred_check_branch
      %37 = sbr.rel (0) target = $region17
    $region16: #{mlp_forward.1} parent=1 // pred_region
      _
    $region17: #{mlp_forward.1} parent=1 // pred_fallthru
      _
    // Predicated region
    $region18: #{mlp_forward.1} parent=1 // pred_check
      _
    $region19: #{mlp_forward.1} parent=1 // pred_check_branch
      %39 = sbr.rel (0) target = $region21
    $region20: #{mlp_forward.1} parent=1 // pred_region
      _
    $region21: #{mlp_forward.1} parent=1 // pred_fallthru
      _
    // Predicated region
    $region22: #{mlp_forward.1} parent=1 // pred_check
      _
    $region23: #{mlp_forward.1} parent=1 // pred_check_branch
      %41 = sbr.rel (0) target = $region25
    $region24: #{mlp_forward.1} parent=1 // pred_region
      %42 = dma.done [#allocation3], 1024
    $region25: #{mlp_forward.1} parent=1 // pred_fallthru
      _
    // Predicated region
    $region26: #{mlp_forward.1} parent=1 // pred_check
      _
    $region27: #{mlp_forward.1} parent=1 // pred_check_branch
      %44 = sbr.rel (0) target = $region29
    $region28: #{mlp_forward.1} parent=1 // pred_region
      %45 = dma.done [#allocation5], 15872
    $region29: #{mlp_forward.1} parent=1 // pred_fallthru
      _
    %v46 = vld [vmem:[#allocation2] sm:$0xff]
    %v47 = vld [vmem:[#allocation2 + $0x8] sm:$0xff]
    %v48 = vld [vmem:[#allocation2 + $0x10] sm:$0xff]
    %v49 = vld [vmem:[#allocation2 + $0x18] sm:$0xff]
    %v50 = vld [vmem:[#allocation2 + $0x20] sm:$0xff]
    %v51 = vld [vmem:[#allocation2 + $0x28] sm:$0xff]
    %v52 = vld [vmem:[#allocation2 + $0x30] sm:$0xff]
    %v53 = vld [vmem:[#allocation2 + $0x38] sm:$0xff]
    %v54 = vld [vmem:[#allocation4] sm:$0xff]
    %v55 = vld [vmem:[#allocation4 + $0x8] sm:$0xff]
    %v56 = vld [vmem:[#allocation4 + $0x10] sm:$0xff]
    %v57 = vld [vmem:[#allocation4 + $0x18] sm:$0xff]
    %v58 = vld [vmem:[#allocation4 + $0x20] sm:$0xff]
    %v59 = vld [vmem:[#allocation4 + $0x28] sm:$0xff]
    %v60 = vld [vmem:[#allocation4 + $0x30] sm:$0xff]
    %v61 = vld [vmem:[#allocation4 + $0x38] sm:$0xff]
    %v62 = vld [vmem:[#allocation4 + $0x40] sm:$0xff]
    %v63 = vld [vmem:[#allocation4 + $0x48] sm:$0xff]
    %v64 = vld [vmem:[#allocation4 + $0x50] sm:$0xff]
    %v65 = vld [vmem:[#allocation4 + $0x58] sm:$0xff]
    %v66 = vld [vmem:[#allocation4 + $0x60] sm:$0xff]
    %v67 = vld [vmem:[#allocation4 + $0x68] sm:$0xff]
    %v68 = vld [vmem:[#allocation4 + $0x70] sm:$0xff]
    %v69 = vld [vmem:[#allocation4 + $0x78] sm:$0xff]
    %v70 = vld [vmem:[#allocation4 + $0x80] sm:$0xff]
    %v71 = vld [vmem:[#allocation4 + $0x88] sm:$0xff]
    %v72 = vld [vmem:[#allocation4 + $0x90] sm:$0xff]
    %v73 = vld [vmem:[#allocation4 + $0x98] sm:$0xff]
    %v74 = vld [vmem:[#allocation4 + $0xa0] sm:$0xff]
    %v75 = vld [vmem:[#allocation4 + $0xa8] sm:$0xff]
    %v76 = vld [vmem:[#allocation4 + $0xb0] sm:$0xff]
    %v77 = vld [vmem:[#allocation4 + $0xb8] sm:$0xff]
    %v78 = vld [vmem:[#allocation4 + $0xc0] sm:$0xff]
    %v79 = vld [vmem:[#allocation4 + $0xc8] sm:$0xff]
    %v80 = vld [vmem:[#allocation4 + $0xd0] sm:$0xff]
    %v81 = vld [vmem:[#allocation4 + $0xd8] sm:$0xff]
    %v82 = vld [vmem:[#allocation4 + $0xe0] sm:$0xff]
    %v83 = vld [vmem:[#allocation4 + $0xe8] sm:$0xff]
    %v84 = vld [vmem:[#allocation4 + $0xf0] sm:$0xff]
    %v85 = vld [vmem:[#allocation4 + $0xf8] sm:$0xff]
    %v86 = vld [vmem:[#allocation4 + $0x100] sm:$0xff]
    %v87 = vld [vmem:[#allocation4 + $0x108] sm:$0xff]
    %v88 = vld [vmem:[#allocation4 + $0x110] sm:$0xff]
    %v89 = vld [vmem:[#allocation4 + $0x118] sm:$0xff]
    %v90 = vld [vmem:[#allocation4 + $0x120] sm:$0xff]
    %v91 = vld [vmem:[#allocation4 + $0x128] sm:$0xff]
    %v92 = vld [vmem:[#allocation4 + $0x130] sm:$0xff]
    %v93 = vld [vmem:[#allocation4 + $0x138] sm:$0xff]
    %v94 = vld [vmem:[#allocation4 + $0x140] sm:$0xff]
    %v95 = vld [vmem:[#allocation4 + $0x148] sm:$0xff]
    %v96 = vld [vmem:[#allocation4 + $0x150] sm:$0xff]
    %v97 = vld [vmem:[#allocation4 + $0x158] sm:$0xff]
    %v98 = vld [vmem:[#allocation4 + $0x160] sm:$0xff]
    %v99 = vld [vmem:[#allocation4 + $0x168] sm:$0xff]
    %v100 = vld [vmem:[#allocation4 + $0x170] sm:$0xff]
    %v101 = vld [vmem:[#allocation4 + $0x178] sm:$0xff]
    %v102 = vld [vmem:[#allocation4 + $0x180] sm:$0xff]
    %v103 = vld [vmem:[#allocation4 + $0x188] sm:$0xff]
    %v104 = vld [vmem:[#allocation4 + $0x190] sm:$0xff]
    %v105 = vld [vmem:[#allocation4 + $0x198] sm:$0xff]
    %v106 = vld [vmem:[#allocation4 + $0x1a0] sm:$0xff]
    %v107 = vld [vmem:[#allocation4 + $0x1a8] sm:$0xff]
    %v108 = vld [vmem:[#allocation4 + $0x1b0] sm:$0xff]
    %v109 = vld [vmem:[#allocation4 + $0x1b8] sm:$0xff]
    %v110 = vld [vmem:[#allocation4 + $0x1c0] sm:$0xff]
    %v111 = vld [vmem:[#allocation4 + $0x1c8] sm:$0xff]
    %v112 = vld [vmem:[#allocation4 + $0x1d0] sm:$0xff]
    %v113 = vld [vmem:[#allocation4 + $0x1d8] sm:$0xff]
    %v114 = vld [vmem:[#allocation4 + $0x1e0] sm:$0xff]
    %v115 = vld [vmem:[#allocation4 + $0x1e8] sm:$0xff]
    %v116 = vld [vmem:[#allocation4 + $0x1f0] sm:$0xff]
    %v117 = vld [vmem:[#allocation4 + $0x1f8] sm:$0xff]
    %v118 = vld [vmem:[#allocation4 + $0x200] sm:$0xff]
    %v119 = vld [vmem:[#allocation4 + $0x208] sm:$0xff]
    %v120 = vld [vmem:[#allocation4 + $0x210] sm:$0xff]
    %v121 = vld [vmem:[#allocation4 + $0x218] sm:$0xff]
    %v122 = vld [vmem:[#allocation4 + $0x220] sm:$0xff]
    %v123 = vld [vmem:[#allocation4 + $0x228] sm:$0xff]
    %v124 = vld [vmem:[#allocation4 + $0x230] sm:$0xff]
    %v125 = vld [vmem:[#allocation4 + $0x238] sm:$0xff]
    %v126 = vld [vmem:[#allocation4 + $0x240] sm:$0xff]
    %v127 = vld [vmem:[#allocation4 + $0x248] sm:$0xff]
    %v128 = vld [vmem:[#allocation4 + $0x250] sm:$0xff]
    %v129 = vld [vmem:[#allocation4 + $0x258] sm:$0xff]
    %v130 = vld [vmem:[#allocation4 + $0x260] sm:$0xff]
    %v131 = vld [vmem:[#allocation4 + $0x268] sm:$0xff]
    %v132 = vld [vmem:[#allocation4 + $0x270] sm:$0xff]
    %v133 = vld [vmem:[#allocation4 + $0x278] sm:$0xff]
    %v134 = vld [vmem:[#allocation4 + $0x280] sm:$0xff]
    %v135 = vld [vmem:[#allocation4 + $0x288] sm:$0xff]
    %v136 = vld [vmem:[#allocation4 + $0x290] sm:$0xff]
    %v137 = vld [vmem:[#allocation4 + $0x298] sm:$0xff]
    %v138 = vld [vmem:[#allocation4 + $0x2a0] sm:$0xff]
    %v139 = vld [vmem:[#allocation4 + $0x2a8] sm:$0xff]
    %v140 = vld [vmem:[#allocation4 + $0x2b0] sm:$0xff]
    %v141 = vld [vmem:[#allocation4 + $0x2b8] sm:$0xff]
    %v142 = vld [vmem:[#allocation4 + $0x2c0] sm:$0xff]
    %v143 = vld [vmem:[#allocation4 + $0x2c8] sm:$0xff]
    %v144 = vld [vmem:[#allocation4 + $0x2d0] sm:$0xff]
    %v145 = vld [vmem:[#allocation4 + $0x2d8] sm:$0xff]
    %v146 = vld [vmem:[#allocation4 + $0x2e0] sm:$0xff]
    %v147 = vld [vmem:[#allocation4 + $0x2e8] sm:$0xff]
    %v148 = vld [vmem:[#allocation4 + $0x2f0] sm:$0xff]
    %v149 = vld [vmem:[#allocation4 + $0x2f8] sm:$0xff]
    %v150 = vld [vmem:[#allocation4 + $0x300] sm:$0xff]
    %v151 = vld [vmem:[#allocation4 + $0x308] sm:$0xff]
    %v152 = vld [vmem:[#allocation4 + $0x310] sm:$0xff]
    %v153 = vld [vmem:[#allocation4 + $0x318] sm:$0xff]
    %v154 = vld [vmem:[#allocation4 + $0x320] sm:$0xff]
    %v155 = vld [vmem:[#allocation4 + $0x328] sm:$0xff]
    %v156 = vld [vmem:[#allocation4 + $0x330] sm:$0xff]
    %v157 = vld [vmem:[#allocation4 + $0x338] sm:$0xff]
    %v158 = vld [vmem:[#allocation4 + $0x340] sm:$0xff]
    %v159 = vld [vmem:[#allocation4 + $0x348] sm:$0xff]
    %v160 = vld [vmem:[#allocation4 + $0x350] sm:$0xff]
    %v161 = vld [vmem:[#allocation4 + $0x358] sm:$0xff]
    %v162 = vld [vmem:[#allocation4 + $0x360] sm:$0xff]
    %v163 = vld [vmem:[#allocation4 + $0x368] sm:$0xff]
    %v164 = vld [vmem:[#allocation4 + $0x370] sm:$0xff]
    %v165 = vld [vmem:[#allocation4 + $0x378] sm:$0xff]
    %v166 = vld [vmem:[#allocation4 + $0x380] sm:$0xff]
    %v167 = vld [vmem:[#allocation4 + $0x388] sm:$0xff]
    %v168 = vld [vmem:[#allocation4 + $0x390] sm:$0xff]
    %v169 = vld [vmem:[#allocation4 + $0x398] sm:$0xff]
    %v170 = vld [vmem:[#allocation4 + $0x3a0] sm:$0xff]
    %v171 = vld [vmem:[#allocation4 + $0x3a8] sm:$0xff]
    %v172 = vld [vmem:[#allocation4 + $0x3b0] sm:$0xff]
    %v173 = vld [vmem:[#allocation4 + $0x3b8] sm:$0xff]
    %v174 = vld [vmem:[#allocation4 + $0x3c0] sm:$0xff]
    %v175 = vld [vmem:[#allocation4 + $0x3c8] sm:$0xff]
    %v176 = vld [vmem:[#allocation4 + $0x3d0] sm:$0xff]
    %v177 = vld [vmem:[#allocation4 + $0x3d8] sm:$0xff]
    %v178 = vld [vmem:[%s2] sm:$0x1]
    %v180 = vlaneseq
    %v181 = vshrl.u32 %v180, 7
    %v182 = vsub.s32 0, %v181
    %v183 = vrot.slane %v178, %v182
    %vm185 = vcmask 785408
    %v187 = vsel %vm185, %v53, 0
    %189 = vmatprep.subr.mxu0 0.0
    %190 = vmatpush1.msra.mxu0 %v54
    %191 = vmatprep.subr.mxu0 0.0
    %192 = vmatpush1.msra.mxu0 %v55
    %193 = vmatprep.subr.mxu0 0.0
    %194 = vmatpush1.msra.mxu0 %v56
    %195 = vmatprep.subr.mxu0 0.0
    %196 = vmatpush1.msra.mxu0 %v57
    %197 = vmatprep.subr.mxu0 0.0
    %198 = vmatpush1.msra.mxu0 %v58
    %199 = vmatprep.subr.mxu0 0.0
    %200 = vmatpush1.msra.mxu0 %v59
    %201 = vmatprep.subr.mxu0 0.0
    %202 = vmatpush1.msra.mxu0 %v60
    %203 = vmatprep.subr.mxu0 0.0
    %204 = vmatpush1.msra.mxu0 %v61
    %205 = vmatprep.subr.mxu0 0.0
    %206 = vmatpush1.msra.mxu0 %v62
    %207 = vmatprep.subr.mxu0 0.0
    %208 = vmatpush1.msra.mxu0 %v63
    %209 = vmatprep.subr.mxu0 0.0
    %210 = vmatpush1.msra.mxu0 %v64
    %211 = vmatprep.subr.mxu0 0.0
    %212 = vmatpush1.msra.mxu0 %v65
    %213 = vmatprep.subr.mxu0 0.0
    %214 = vmatpush1.msra.mxu0 %v66
    %215 = vmatprep.subr.mxu0 0.0
    %216 = vmatpush1.msra.mxu0 %v67
    %217 = vmatprep.subr.mxu0 0.0
    %218 = vmatpush1.msra.mxu0 %v68
    %219 = vmatprep.subr.mxu0 0.0
    %220 = vmatpush1.msra.mxu0 %v69
    %221 = vmatprep.subr.mxu0 0.0
    %222 = vmatpush1.msra.mxu0 %v70
    %223 = vmatprep.subr.mxu0 0.0
    %224 = vmatpush1.msra.mxu0 %v71
    %225 = vmatprep.subr.mxu0 0.0
    %226 = vmatpush1.msra.mxu0 %v72
    %227 = vmatprep.subr.mxu0 0.0
    %228 = vmatpush1.msra.mxu0 %v73
    %229 = vmatprep.subr.mxu0 0.0
    %230 = vmatpush1.msra.mxu0 %v74
    %231 = vmatprep.subr.mxu0 0.0
    %232 = vmatpush1.msra.mxu0 %v75
    %233 = vmatprep.subr.mxu0 0.0
    %234 = vmatpush1.msra.mxu0 %v76
    %235 = vmatprep.subr.mxu0 0.0
    %236 = vmatpush1.msra.mxu0 %v77
    %237 = vmatprep.subr.mxu0 0.0
    %238 = vmatpush1.msra.mxu0 %v78
    %239 = vmatprep.subr.mxu0 0.0
    %240 = vmatpush1.msra.mxu0 %v79
    %241 = vmatprep.subr.mxu0 0.0
    %242 = vmatpush1.msra.mxu0 %v80
    %243 = vmatprep.subr.mxu0 0.0
    %244 = vmatpush1.msra.mxu0 %v81
    %245 = vmatprep.subr.mxu0 0.0
    %246 = vmatpush1.msra.mxu0 %v82
    %247 = vmatprep.subr.mxu0 0.0
    %248 = vmatpush1.msra.mxu0 %v83
    %249 = vmatprep.subr.mxu0 0.0
    %250 = vmatpush1.msra.mxu0 %v84
    %251 = vmatprep.subr.mxu0 0.0
    %252 = vmatpush1.msra.mxu0 %v85
    %253 = vmatprep.mubr.f32.mxu0 %v47
    %254 = vmatmul.mubr.f32.gmra.mrb[0].mxu0 %v46
    %v255 = vpop.f32.mrb[0].mxu0
    %v256 = vadd.f32 %v183, %v255
    %v257 = vpop.f32.mrb[0].mxu0
    %258 = vdwg.mxu0
    %259 = vmatprep.subr.mxu0 0.0
    %260 = vmatpush1.msra.mxu0 %v86
    %261 = vmatprep.subr.mxu0 0.0
    %262 = vmatpush1.msra.mxu0 %v87
    %263 = vmatprep.subr.mxu0 0.0
    %264 = vmatpush1.msra.mxu0 %v88
    %265 = vmatprep.subr.mxu0 0.0
    %266 = vmatpush1.msra.mxu0 %v89
    %267 = vmatprep.subr.mxu0 0.0
    %268 = vmatpush1.msra.mxu0 %v90
    %269 = vmatprep.subr.mxu0 0.0
    %270 = vmatpush1.msra.mxu0 %v91
    %271 = vmatprep.subr.mxu0 0.0
    %272 = vmatpush1.msra.mxu0 %v92
    %273 = vmatprep.subr.mxu0 0.0
    %274 = vmatpush1.msra.mxu0 %v93
    %275 = vmatprep.subr.mxu0 0.0
    %276 = vmatpush1.msra.mxu0 %v94
    %277 = vmatprep.subr.mxu0 0.0
    %278 = vmatpush1.msra.mxu0 %v95
    %279 = vmatprep.subr.mxu0 0.0
    %280 = vmatpush1.msra.mxu0 %v96
    %281 = vmatprep.subr.mxu0 0.0
    %282 = vmatpush1.msra.mxu0 %v97
    %283 = vmatprep.subr.mxu0 0.0
    %284 = vmatpush1.msra.mxu0 %v98
    %285 = vmatprep.subr.mxu0 0.0
    %286 = vmatpush1.msra.mxu0 %v99
    %287 = vmatprep.subr.mxu0 0.0
    %288 = vmatpush1.msra.mxu0 %v100
    %289 = vmatprep.subr.mxu0 0.0
    %290 = vmatpush1.msra.mxu0 %v101
    %291 = vmatprep.subr.mxu0 0.0
    %292 = vmatpush1.msra.mxu0 %v102
    %293 = vmatprep.subr.mxu0 0.0
    %294 = vmatpush1.msra.mxu0 %v103
    %295 = vmatprep.subr.mxu0 0.0
    %296 = vmatpush1.msra.mxu0 %v104
    %297 = vmatprep.subr.mxu0 0.0
    %298 = vmatpush1.msra.mxu0 %v105
    %299 = vmatprep.subr.mxu0 0.0
    %300 = vmatpush1.msra.mxu0 %v106
    %301 = vmatprep.subr.mxu0 0.0
    %302 = vmatpush1.msra.mxu0 %v107
    %303 = vmatprep.subr.mxu0 0.0
    %304 = vmatpush1.msra.mxu0 %v108
    %305 = vmatprep.subr.mxu0 0.0
    %306 = vmatpush1.msra.mxu0 %v109
    %307 = vmatprep.subr.mxu0 0.0
    %308 = vmatpush1.msra.mxu0 %v110
    %309 = vmatprep.subr.mxu0 0.0
    %310 = vmatpush1.msra.mxu0 %v111
    %311 = vmatprep.subr.mxu0 0.0
    %312 = vmatpush1.msra.mxu0 %v112
    %313 = vmatprep.subr.mxu0 0.0
    %314 = vmatpush1.msra.mxu0 %v113
    %315 = vmatprep.subr.mxu0 0.0
    %316 = vmatpush1.msra.mxu0 %v114
    %317 = vmatprep.subr.mxu0 0.0
    %318 = vmatpush1.msra.mxu0 %v115
    %319 = vmatprep.subr.mxu0 0.0
    %320 = vmatpush1.msra.mxu0 %v116
    %321 = vmatprep.subr.mxu0 0.0
    %322 = vmatpush1.msra.mxu0 %v117
    %323 = vmatprep.mubr.f32.mxu0 %v49
    %324 = vmatmul.mubr.f32.gmra.mrb[0].mxu0 %v48
    %v325 = vpop.f32.mrb[0].mxu0
    %v326 = vadd.f32 %v256, %v325
    %v327 = vpop.f32.mrb[0].mxu0
    %328 = vdwg.mxu0
    %329 = vmatprep.subr.mxu0 0.0
    %330 = vmatpush1.msra.mxu0 %v118
    %331 = vmatprep.subr.mxu0 0.0
    %332 = vmatpush1.msra.mxu0 %v119
    %333 = vmatprep.subr.mxu0 0.0
    %334 = vmatpush1.msra.mxu0 %v120
    %335 = vmatprep.subr.mxu0 0.0
    %336 = vmatpush1.msra.mxu0 %v121
    %337 = vmatprep.subr.mxu0 0.0
    %338 = vmatpush1.msra.mxu0 %v122
    %339 = vmatprep.subr.mxu0 0.0
    %340 = vmatpush1.msra.mxu0 %v123
    %341 = vmatprep.subr.mxu0 0.0
    %342 = vmatpush1.msra.mxu0 %v124
    %343 = vmatprep.subr.mxu0 0.0
    %344 = vmatpush1.msra.mxu0 %v125
    %345 = vmatprep.subr.mxu0 0.0
    %346 = vmatpush1.msra.mxu0 %v126
    %347 = vmatprep.subr.mxu0 0.0
    %348 = vmatpush1.msra.mxu0 %v127
    %349 = vmatprep.subr.mxu0 0.0
    %350 = vmatpush1.msra.mxu0 %v128
    %351 = vmatprep.subr.mxu0 0.0
    %352 = vmatpush1.msra.mxu0 %v129
    %353 = vmatprep.subr.mxu0 0.0
    %354 = vmatpush1.msra.mxu0 %v130
    %355 = vmatprep.subr.mxu0 0.0
    %356 = vmatpush1.msra.mxu0 %v131
    %357 = vmatprep.subr.mxu0 0.0
    %358 = vmatpush1.msra.mxu0 %v132
    %359 = vmatprep.subr.mxu0 0.0
    %360 = vmatpush1.msra.mxu0 %v133
    %361 = vmatprep.subr.mxu0 0.0
    %362 = vmatpush1.msra.mxu0 %v134
    %363 = vmatprep.subr.mxu0 0.0
    %364 = vmatpush1.msra.mxu0 %v135
    %365 = vmatprep.subr.mxu0 0.0
    %366 = vmatpush1.msra.mxu0 %v136
    %367 = vmatprep.subr.mxu0 0.0
    %368 = vmatpush1.msra.mxu0 %v137
    %369 = vmatprep.subr.mxu0 0.0
    %370 = vmatpush1.msra.mxu0 %v138
    %371 = vmatprep.subr.mxu0 0.0
    %372 = vmatpush1.msra.mxu0 %v139
    %373 = vmatprep.subr.mxu0 0.0
    %374 = vmatpush1.msra.mxu0 %v140
    %375 = vmatprep.subr.mxu0 0.0
    %376 = vmatpush1.msra.mxu0 %v141
    %377 = vmatprep.subr.mxu0 0.0
    %378 = vmatpush1.msra.mxu0 %v142
    %379 = vmatprep.subr.mxu0 0.0
    %380 = vmatpush1.msra.mxu0 %v143
    %381 = vmatprep.subr.mxu0 0.0
    %382 = vmatpush1.msra.mxu0 %v144
    %383 = vmatprep.subr.mxu0 0.0
    %384 = vmatpush1.msra.mxu0 %v145
    %385 = vmatprep.subr.mxu0 0.0
    %386 = vmatpush1.msra.mxu0 %v146
    %387 = vmatprep.subr.mxu0 0.0
    %388 = vmatpush1.msra.mxu0 %v147
    %389 = vmatprep.subr.mxu0 0.0
    %390 = vmatpush1.msra.mxu0 %v148
    %391 = vmatprep.subr.mxu0 0.0
    %392 = vmatpush1.msra.mxu0 %v149
    %393 = vmatprep.mubr.f32.mxu0 %v51
    %394 = vmatmul.mubr.f32.gmra.mrb[0].mxu0 %v50
    %v395 = vpop.f32.mrb[0].mxu0
    %v396 = vadd.f32 %v326, %v395
    %v397 = vpop.f32.mrb[0].mxu0
    %398 = vdwg.mxu0
    %399 = vmatprep.subr.mxu0 0.0
    %400 = vmatpush1.msra.mxu0 %v150
    %401 = vmatprep.subr.mxu0 0.0
    %402 = vmatpush1.msra.mxu0 %v151
    %403 = vmatprep.subr.mxu0 0.0
    %404 = vmatpush1.msra.mxu0 %v152
    %405 = vmatprep.subr.mxu0 0.0
    %406 = vmatpush1.msra.mxu0 %v153
    %407 = vmatprep.subr.mxu0 0.0
    %408 = vmatpush1.msra.mxu0 %v154
    %409 = vmatprep.subr.mxu0 0.0
    %410 = vmatpush1.msra.mxu0 %v155
    %411 = vmatprep.subr.mxu0 0.0
    %412 = vmatpush1.msra.mxu0 %v156
    %413 = vmatprep.subr.mxu0 0.0
    %414 = vmatpush1.msra.mxu0 %v157
    %415 = vmatprep.subr.mxu0 0.0
    %416 = vmatpush1.msra.mxu0 %v158
    %417 = vmatprep.subr.mxu0 0.0
    %418 = vmatpush1.msra.mxu0 %v159
    %419 = vmatprep.subr.mxu0 0.0
    %420 = vmatpush1.msra.mxu0 %v160
    %421 = vmatprep.subr.mxu0 0.0
    %422 = vmatpush1.msra.mxu0 %v161
    %423 = vmatprep.subr.mxu0 0.0
    %424 = vmatpush1.msra.mxu0 %v162
    %425 = vmatprep.subr.mxu0 0.0
    %426 = vmatpush1.msra.mxu0 %v163
    %427 = vmatprep.subr.mxu0 0.0
    %428 = vmatpush1.msra.mxu0 %v164
    %429 = vmatprep.subr.mxu0 0.0
    %430 = vmatpush1.msra.mxu0 %v165
    %431 = vmatprep.subr.mxu0 0.0
    %432 = vmatpush1.msra.mxu0 %v166
    %433 = vmatprep.subr.mxu0 0.0
    %434 = vmatpush1.msra.mxu0 %v167
    %435 = vmatprep.subr.mxu0 0.0
    %436 = vmatpush1.msra.mxu0 %v168
    %437 = vmatprep.subr.mxu0 0.0
    %438 = vmatpush1.msra.mxu0 %v169
    %439 = vmatprep.subr.mxu0 0.0
    %440 = vmatpush1.msra.mxu0 %v170
    %441 = vmatprep.subr.mxu0 0.0
    %442 = vmatpush1.msra.mxu0 %v171
    %443 = vmatprep.subr.mxu0 0.0
    %444 = vmatpush1.msra.mxu0 %v172
    %445 = vmatprep.subr.mxu0 0.0
    %446 = vmatpush1.msra.mxu0 %v173
    %447 = vmatprep.subr.mxu0 0.0
    %448 = vmatpush1.msra.mxu0 %v174
    %449 = vmatprep.subr.mxu0 0.0
    %450 = vmatpush1.msra.mxu0 %v175
    %451 = vmatprep.subr.mxu0 0.0
    %452 = vmatpush1.msra.mxu0 %v176
    %453 = vmatprep.subr.mxu0 0.0
    %454 = vmatpush1.msra.mxu0 %v177
    %455 = vmatprep.subr.mxu0 0.0
    %456 = vmatpush1.msra.mxu0 0.0
    %457 = vmatprep.subr.mxu0 0.0
    %458 = vmatpush1.msra.mxu0 0.0
    %459 = vmatprep.subr.mxu0 0.0
    %460 = vmatpush1.msra.mxu0 0.0
    %461 = vmatprep.subr.mxu0 0.0
    %462 = vmatpush1.msra.mxu0 0.0
    %463 = vmatprep.mubr.f32.mxu0 %v187
    %464 = vmatmul.mubr.f32.gmra.mrb[0].mxu0 %v52
    %v465 = vpop.f32.mrb[0].mxu0
    %v466 = vadd.f32 %v396, %v465
    %v467 = vpop.f32.mrb[0].mxu0
    %468 = vdwg.mxu0
    %v469 = vxor.u32 %v466, 2147483648
    %v470 = vmul.f32 %v469, 1.442695
    %v471 = vpow.pop %v470
    %v472 = vadd.f32 %v471, 1.0
    %v473 = vrcp.pop %v472
    %v474 = vmul.f32 1.0, %v473
    %v475 = vld [vmem:[%s3] sm:$0x1]
    %v477 = vlaneseq
    %v478 = vshrl.u32 %v477, 7
    %v479 = vsub.s32 0, %v478
    %v480 = vrot.slane %v475, %v479
    %v482 = vmul.f32 %v474, %v480
    %483 = vadd.xlane.f32.xlu0 %v482
    %v484 = vpop.xlane.xlu0 %483
    %v485 = vld [vmem:[%s4] sm:$0x1]
    %v487 = vlaneseq
    %v488 = vshrl.u32 %v487, 7
    %v489 = vsub.s32 0, %v488
    %v490 = vrot.slane %v485, %v489
    %v492 = vadd.f32 %v484, %v490
    %493 = vst [vmem:[%s5] sm:$0xff] %v492
    // Predicated region
    $region30: #{mlp_forward.1} parent=1 // pred_check
      _
    $region31: #{mlp_forward.1} parent=1 // pred_check_branch
      %495 = sbr.rel (0) target = $region33
    $region32: #{mlp_forward.1} parent=1 // pred_region
      _
    $region33: #{mlp_forward.1} parent=1 // pred_fallthru
      _
    // Predicated region
    $region34: #{mlp_forward.1} parent=1 // pred_check
      _
    $region35: #{mlp_forward.1} parent=1 // pred_check_branch
      %497 = sbr.rel (0) target = $region37
    $region36: #{mlp_forward.1} parent=1 // pred_region
      _
    $region37: #{mlp_forward.1} parent=1 // pred_fallthru
      _
    %498 = vsyncpa [#allocation3], 1
    %499 = vsyncpa [#allocation5], 1

</llo_original>
